<compile_context>
chip_gen: v6e
topology: v6e:2x2x1
jax: 0.10.0
libtpu: 0.0.40
codegen_flags: <defaults>
</compile_context>

<pallas_src>
import functools

import jax
import jax.numpy as jnp
import numpy as np
from jax import lax
from jax.experimental import pallas as pl
from jax.experimental.pallas import tpu as pltpu


def _mha_fusion_kernel(x_ref, w_ref, head_ref, y_ref):
    """x_ref: (2B, d_u) rows = [h ; Label] (f32).  w_ref: (d_u, d_model+2) folded weights.

    head_ref: (B, d_model)   y_ref: (B, 1)
    """
    B, d_model = head_ref.shape

    xv = x_ref[...]                              # (2B, d_u)
    hv = xv[:B, :]                               # (B, d_u)
    lv = xv[B:, :]                               # (B, d_u)  (Label.float())

    # ---- cosine similarity along feature dim (torch F.cosine_similarity, dim=2, eps=1e-8)
    # torch clamps each norm at eps  <=>  clamp each squared norm at eps^2;
    # 1/(sqrt(a)*sqrt(b)) == rsqrt(a*b)  -> one EUP rsqrt, no divide.
    dot = jnp.sum(hv * lv, axis=1, keepdims=True)             # (B, 1)
    hh = jnp.sum(hv * hv, axis=1, keepdims=True)              # (B, 1)
    ll = jnp.sum(lv * lv, axis=1, keepdims=True)              # (B, 1)
    eps2 = jnp.float32(1e-16)                                  # eps^2, eps = 1e-8
    beta = dot * lax.rsqrt(jnp.maximum(hh, eps2) * jnp.maximum(ll, eps2))   # (B, 1)

    # ---- one fused MXU dot for all three projections (wq, wv^T@wk fold, wo@wq fold)
    proj = jnp.dot(xv, w_ref[...], preferred_element_type=jnp.float32)      # (2B, d_model+2)
    hq = proj[:B, :d_model]                        # h @ wq^T                  (B, d_model)
    t = proj[B:, d_model:d_model + 1]              # Label @ wv^T @ wk         (B, 1)
    hwoq = proj[:B, d_model + 1:d_model + 2]       # h @ wq^T @ wo^T           (B, 1)

    # ---- rank-1 collapse of (h_ @ beta_^T) @ Label_  and of  wo @ head
    s = beta * t                                   # (B, 1)
    head_ref[...] = hq * s                         # (B, d_model)
    y_ref[...] = hwoq * s                          # (B, 1)


def make_multi_head_attention(wq, wk, wv, wo):
    """Builds the jitted forward. All static weight preprocessing happens ONCE here."""
    d_model, d_u = wq.shape
    d_c = wk.shape[1]
    assert d_c == 1, "module is only shape-consistent for d_c == seq_len == 1"

    wq32 = wq.astype(jnp.float32)
    wvk = wv.astype(jnp.float32).T @ wk.astype(jnp.float32)          # (d_u, 1)
    woq = (wo.astype(jnp.float32) @ wq32).T                          # (d_u, 1)
    W = jnp.concatenate([wq32.T, wvk, woq], axis=1)                  # (d_u, d_model + 2)

    vmem = pl.BlockSpec(memory_space=pltpu.MemorySpace.VMEM)

    @jax.jit
    def forward(h, label):
        B, T, du = h.shape
        assert du == d_u and T == d_c, "seq len must equal d_c (== 1)"

        h2d = h.reshape(B, d_u).astype(jnp.float32)
        l2d = label.reshape(B, d_u).astype(jnp.float32)              # Label.float()
        x = jnp.concatenate([h2d, l2d], axis=0)                      # (2B, d_u)

        head, y = pl.pallas_call(
            _mha_fusion_kernel,
            out_shape=(
                jax.ShapeDtypeStruct((B, d_model), jnp.float32),     # head
                jax.ShapeDtypeStruct((B, 1), jnp.float32),           # y_hat
            ),
            in_specs=[vmem, vmem],
            out_specs=(vmem, vmem),
        )(x, W)

        # Match torch output shapes: y_hat (B, 1), head (B, d_model, 1)
        return y, head.reshape(B, d_model, 1)

    return forward


# ----------------- parameter init (xavier_uniform, gain = calculate_gain('relu')) -----------------
def xavier_uniform(key, shape, gain=float(np.sqrt(2.0))):
    fan_out, fan_in = shape                     # torch convention for 2-D tensors
    bound = gain * (6.0 / (fan_in + fan_out)) ** 0.5
    return jax.random.uniform(key, shape, jnp.float32, -bound, bound)


# ----------------- pure-JAX reference (mirrors the torch forward op-by-op) -----------------
def _reference(h, label, wq, wk, wv, wo):
    B = h.shape[0]
    label = label.astype(jnp.float32)
    dot = jnp.sum(h * label, axis=2)
    n1 = jnp.sqrt(jnp.sum(h * h, axis=2))
    n2 = jnp.sqrt(jnp.sum(label * label, axis=2))
    eps = 1e-8
    # torch F.cosine_similarity clamps each norm separately at eps
    beta = dot / (jnp.maximum(n1, eps) * jnp.maximum(n2, eps))
    h_ = jnp.einsum('mu,bun->bmn', wq, jnp.transpose(h, (0, 2, 1)))
    beta_ = jnp.einsum('mc,bcn->bmn', wk, beta.reshape(B, -1, 1))
    label_ = jnp.einsum('mu,bun->bmn', wv, jnp.transpose(label, (0, 2, 1)))
    h2l = jnp.einsum('bmk,bkn->bmn', h_, jnp.transpose(beta_, (0, 2, 1)))
    head = jnp.einsum('bmk,bkn->bmn', h2l, label_)
    y = jnp.einsum('om,bmn->bon', wo, head)
    return y[:, 0, :], head


if __name__ == "__main__":
    B = 2
    atte_d_model = 32   # d_model
    d_u = 16
    d_c = 1
    T = d_c             # seq length forced to d_c (== 1) by the module's matmul shapes

    key = jax.random.PRNGKey(0)
    k1, k2, k3, k4, k5, k6 = jax.random.split(key, 6)
    h = jax.random.normal(k1, (B, T, d_u), jnp.float32)
    label = jax.random.normal(k2, (B, T, d_u), jnp.float32)
    wq = xavier_uniform(k3, (atte_d_model, d_u))
    wk = xavier_uniform(k4, (atte_d_model, d_c))
    wv = xavier_uniform(k5, (atte_d_model, d_u))
    wo = xavier_uniform(k6, (1, atte_d_model))

    mha_forward = make_multi_head_attention(wq, wk, wv, wo)

    y_hat, head = mha_forward(h, label)
    jax.block_until_ready((y_hat, head))

    y_ref, head_ref = _reference(h, label, wq, wk, wv, wo)
    np.testing.assert_allclose(np.asarray(y_hat), np.asarray(y_ref), rtol=1e-5, atol=1e-5)
    np.testing.assert_allclose(np.asarray(head), np.asarray(head_ref), rtol=1e-5, atol=1e-5)
    assert y_hat.shape == (B, 1) and head.shape == (B, atte_d_model, 1)

    # TODO(synk): nn.Dropout arg exists in __init__ but is never applied in forward; nothing to port.
    print("KERNEL_OK")
</pallas_src>

<mosaic_0001>
module attributes {stable_mosaic.version = 11 : i64} {
  func.func @_mha_fusion_kernel(%arg0: memref<4x16xf32, #tpu.memory_space<vmem>>, %arg1: memref<16x34xf32, #tpu.memory_space<vmem>>, %arg2: memref<2x32xf32, #tpu.memory_space<vmem>>, %arg3: memref<2x1xf32, #tpu.memory_space<vmem>>) attributes {dimension_semantics = [], scalar_prefetch = 0 : i64, scratch_operands = 0 : i64, tpu.core_type = #tpu.core_type<tc>} {
    %c0 = arith.constant 0 : index
    %c0_0 = arith.constant 0 : index
    %0 = vector.load %arg0[%c0, %c0_0] : memref<4x16xf32, #tpu.memory_space<vmem>>, vector<4x16xf32>
    %1 = vector.extract_strided_slice %0 {offsets = [0, 0], sizes = [2, 16], strides = [1, 1]} : vector<4x16xf32> to vector<2x16xf32>
    %2 = vector.extract_strided_slice %0 {offsets = [2, 0], sizes = [2, 16], strides = [1, 1]} : vector<4x16xf32> to vector<2x16xf32>
    %3 = arith.mulf %1, %2 : vector<2x16xf32>
    %cst = arith.constant dense<0.000000e+00> : vector<2xf32>
    %4 = vector.multi_reduction <add>, %3, %cst [1] : vector<2x16xf32> to vector<2xf32>
    %5 = vector.shape_cast %4 : vector<2xf32> to vector<2x1xf32>
    %6 = arith.mulf %1, %1 : vector<2x16xf32>
    %cst_1 = arith.constant dense<0.000000e+00> : vector<2xf32>
    %7 = vector.multi_reduction <add>, %6, %cst_1 [1] : vector<2x16xf32> to vector<2xf32>
    %8 = vector.shape_cast %7 : vector<2xf32> to vector<2x1xf32>
    %9 = arith.mulf %2, %2 : vector<2x16xf32>
    %cst_2 = arith.constant dense<0.000000e+00> : vector<2xf32>
    %10 = vector.multi_reduction <add>, %9, %cst_2 [1] : vector<2x16xf32> to vector<2xf32>
    %11 = vector.shape_cast %10 : vector<2xf32> to vector<2x1xf32>
    %cst_3 = arith.constant 1.000000e-16 : f32
    %12 = vector.broadcast %cst_3 : f32 to vector<2x1xf32>
    %13 = arith.maximumf %8, %12 : vector<2x1xf32>
    %cst_4 = arith.constant 1.000000e-16 : f32
    %14 = vector.broadcast %cst_4 : f32 to vector<2x1xf32>
    %15 = arith.maximumf %11, %14 : vector<2x1xf32>
    %16 = arith.mulf %13, %15 : vector<2x1xf32>
    %17 = math.rsqrt %16 : vector<2x1xf32>
    %18 = arith.mulf %5, %17 : vector<2x1xf32>
    %c0_5 = arith.constant 0 : index
    %c0_6 = arith.constant 0 : index
    %19 = vector.load %arg1[%c0_5, %c0_6] : memref<16x34xf32, #tpu.memory_space<vmem>>, vector<16x34xf32>
    %cst_7 = arith.constant dense<0.000000e+00> : vector<4x34xf32>
    %20 = tpu.matmul %0, %19, %cst_7 {dimension_numbers = #tpu.dot_dimension_numbers<[1], [0], [0], [1], [0, 0, 1, 1], [], []>} : vector<4x16xf32>, vector<16x34xf32>, vector<4x34xf32> -> vector<4x34xf32>
    %21 = vector.extract_strided_slice %20 {offsets = [0, 0], sizes = [2, 32], strides = [1, 1]} : vector<4x34xf32> to vector<2x32xf32>
    %22 = vector.extract_strided_slice %20 {offsets = [2, 32], sizes = [2, 1], strides = [1, 1]} : vector<4x34xf32> to vector<2x1xf32>
    %23 = vector.extract_strided_slice %20 {offsets = [0, 33], sizes = [2, 1], strides = [1, 1]} : vector<4x34xf32> to vector<2x1xf32>
    %24 = arith.mulf %18, %22 : vector<2x1xf32>
    %25 = vector.broadcast %24 : vector<2x1xf32> to vector<2x32xf32>
    %26 = arith.mulf %21, %25 : vector<2x32xf32>
    %c0_8 = arith.constant 0 : index
    %c0_9 = arith.constant 0 : index
    %27 = vector.load %arg2[%c0_8, %c0_9] : memref<2x32xf32, #tpu.memory_space<vmem>>, vector<2x32xf32>
    tpu.vector_store %arg2[%c0_8, %c0_9], %26 {strides = array<i32>} : memref<2x32xf32, #tpu.memory_space<vmem>>, vector<2x32xf32>,
    %28 = arith.mulf %23, %24 : vector<2x1xf32>
    %c0_10 = arith.constant 0 : index
    %c0_11 = arith.constant 0 : index
    %29 = vector.load %arg3[%c0_10, %c0_11] : memref<2x1xf32, #tpu.memory_space<vmem>>, vector<2x1xf32>
    tpu.vector_store %arg3[%c0_10, %c0_11], %28 {strides = array<i32>} : memref<2x1xf32, #tpu.memory_space<vmem>>, vector<2x1xf32>,
    return
  }
}

</mosaic_0001>

<llo_original>
// kernel: forward.1
$region0: #{forward.1}
  #allocation0 [shape = 'u32[]', space=smem, size = 0x4, offset = 0x4, fixed_abs, tag = 'smem constant byte address 0x4 - core index']
  #allocation1 [shape = 'u32[144,128]{1,0:T(1,128)}', space=vmem, size = 0x12000, scoped, tag = 'internal scratch']
  %s0 = inlined_call_operand.vmem [shape: f32[4,16], index: 0, kind: input, shape index: {}]
  %s1 = inlined_call_operand.hbm [shape: f32[16,34], index: 1, kind: input, shape index: {}]
  %s2 = inlined_call_operand.hbm [shape: f32[2,32], index: 2, kind: output, shape index: {0}]
  %s3 = inlined_call_operand.vmem [shape: f32[2,1], index: 3, kind: output, shape index: {1}]
  %4 = xla_tuple %s2, %s3
  %s5 = sld [smem:[#allocation0]]
  $region30: #{forward.1} parent=0
    _
  %s7 = ssub.s32 1, %s5
  %s8 = scalar_select 0, %s7, %s5
  $region1: #{forward.1} parent=0
    #allocation2 [shape = 'u8[8192]{0}', space=vmem, size = 0x2000, scoped, tag = 'input window, operand 1, single buffered']
    #allocation3 [shape = 's32[1]{0}', space=sflag, size = 0x4, scoped, tag = 'scoped memory for forward.1']
    #allocation4 [shape = 's32[1]{0}', space=sflag, size = 0x4, scoped, tag = 'scoped memory for forward.1']
    #allocation5 [shape = 'u8[1024]{0}', space=vmem, size = 0x400, scoped, tag = 'output window, operand 0, single buffered']
    %9 = vsyncpa [#allocation3], 0
    %10 = vsyncpa [#allocation4], 0
    // Predicated region
    $region2: #{forward.1} parent=1 // pred_check
      _
    $region3: #{forward.1} parent=1 // pred_check_branch
      %12 = sbr.rel (0) target = $region5
    $region4: #{forward.1} parent=1 // pred_region
      _
    $region5: #{forward.1} parent=1 // pred_fallthru
      _
    // Predicated region
    $region6: #{forward.1} parent=1 // pred_check
      _
    $region7: #{forward.1} parent=1 // pred_check_branch
      %14 = sbr.rel (0) target = $region9
    $region8: #{forward.1} parent=1 // pred_region
      %s16 = ssub.s32 256, 256
      %17 = vsyncadd [#allocation3], %s16
      %s18 = sshll.u32 [#allocation2], 4
      %s19 = int_to_ptr.vmem [resolvable:$true] %s18
      %24 = dma.hbm_to_vmem [thread:$0]  %s1, 256, %s19, [#allocation3], 128, 128, 8
    $region9: #{forward.1} parent=1 // pred_fallthru
      _
    // Predicated region
    $region10: #{forward.1} parent=1 // pred_check
      _
    $region11: #{forward.1} parent=1 // pred_check_branch
      %26 = sbr.rel (0) target = $region13
    $region12: #{forward.1} parent=1 // pred_region
      %27 = dma.done [#allocation3], 256
    $region13: #{forward.1} parent=1 // pred_fallthru
      _
    %v28 = vld [vmem:[%s0] sm:$0xf]
    %v30 = vrot.slane %v28, 2
    %v32 = vmul.f32 %v28, %v30
    %vm33 = vcmask 123904
    %v34 = vsel %vm33, %v32, 0.0
    %35 = vadd.xlane.f32.xlu0 %v34
    %v36 = vpop.xlane.xlu0 %35
    %v37 = vmul.f32 %v28, %v28
    %v38 = vsel %vm33, %v37, 0.0
    %39 = vadd.xlane.f32.xlu0 %v38
    %v40 = vpop.xlane.xlu0 %39
    %vm41 = vcmask 125954
    %v42 = vsel %vm41, %v37, 0.0
    %43 = vadd.xlane.f32.xlu0 %v42
    %v44 = vpop.xlane.xlu0 %43
    %v45 = vmax.f32 %v40, 1e-16
    %v46 = vmax.f32 %v44, 1e-16
    %v48 = vrot.slane %v46, 2
    %v50 = vmul.f32 %v45, %v48
    %v51 = vrsqrt.pop %v50
    %v52 = vmul.f32 %v36, %v51
    %v53 = vld [vmem:[#allocation2] sm:$0xff]
    %v54 = vld [vmem:[#allocation2 + $0x8] sm:$0xff]
    %vm55 = vcmask 130048
    %v56 = vsel %vm55, %v28, 0
    %58 = vmatprep.subr.mxu0 0.0
    %59 = vmatpush1.msra.mxu0 0.0
    %60 = vmatprep.subr.mxu0 0.0
    %61 = vmatpush1.msra.mxu0 0.0
    %62 = vmatprep.subr.mxu0 0.0
    %63 = vmatpush1.msra.mxu0 0.0
    %64 = vmatprep.subr.mxu0 0.0
    %65 = vmatpush1.msra.mxu0 0.0
    %66 = vmatprep.subr.mxu0 0.0
    %67 = vmatpush1.msra.mxu0 0.0
    %68 = vmatprep.subr.mxu0 0.0
    %69 = vmatpush1.msra.mxu0 0.0
    %70 = vmatprep.subr.mxu0 0.0
    %71 = vmatpush1.msra.mxu0 0.0
    %72 = vmatprep.subr.mxu0 0.0
    %73 = vmatpush1.msra.mxu0 0.0
    %74 = vmatprep.subr.mxu0 0.0
    %75 = vmatpush1.msra.mxu0 0.0
    %76 = vmatprep.subr.mxu0 0.0
    %77 = vmatpush1.msra.mxu0 0.0
    %78 = vmatprep.subr.mxu0 0.0
    %79 = vmatpush1.msra.mxu0 0.0
    %80 = vmatprep.subr.mxu0 0.0
    %81 = vmatpush1.msra.mxu0 0.0
    %82 = vmatprep.subr.mxu0 0.0
    %83 = vmatpush1.msra.mxu0 0.0
    %84 = vmatprep.subr.mxu0 0.0
    %85 = vmatpush1.msra.mxu0 0.0
    %86 = vmatprep.subr.mxu0 0.0
    %87 = vmatpush1.msra.mxu0 %v54
    %88 = vmatprep.subr.mxu0 0.0
    %89 = vmatpush1.msra.mxu0 %v53
    %90 = vmatprep.subr.mxu0 0.0
    %91 = vmatpush2.msra.mxu0 0.0
    %92 = vmatprep.subr.mxu0 0.0
    %93 = vmatpush2.msra.mxu0 0.0
    %94 = vmatprep.subr.mxu0 0.0
    %95 = vmatpush2.msra.mxu0 0.0
    %96 = vmatprep.subr.mxu0 0.0
    %97 = vmatpush2.msra.mxu0 0.0
    %98 = vmatprep.subr.mxu0 0.0
    %99 = vmatpush2.msra.mxu0 0.0
    %100 = vmatprep.subr.mxu0 0.0
    %101 = vmatpush2.msra.mxu0 0.0
    %102 = vmatprep.subr.mxu0 0.0
    %103 = vmatpush2.msra.mxu0 0.0
    %104 = vmatprep.subr.mxu0 0.0
    %105 = vmatpush2.msra.mxu0 0.0
    %106 = vmatprep.subr.mxu0 0.0
    %107 = vmatpush2.msra.mxu0 0.0
    %108 = vmatprep.subr.mxu0 0.0
    %109 = vmatpush2.msra.mxu0 0.0
    %110 = vmatprep.subr.mxu0 0.0
    %111 = vmatpush2.msra.mxu0 0.0
    %112 = vmatprep.subr.mxu0 0.0
    %113 = vmatpush2.msra.mxu0 0.0
    %114 = vmatprep.subr.mxu0 0.0
    %115 = vmatpush2.msra.mxu0 0.0
    %116 = vmatprep.subr.mxu0 0.0
    %117 = vmatpush2.msra.mxu0 0.0
    %118 = vmatprep.subr.mxu0 0.0
    %119 = vmatpush2.msra.mxu0 0.0
    %120 = vmatprep.subr.mxu0 0.0
    %121 = vmatpush2.msra.mxu0 0.0
    %122 = vmatprep.mubr.f32.mxu0 0.0
    %123 = vmatmul.mubr.f32.gmra.mxu0 %v56
    %v124 = vpop.f32.mrf.mxu0
    %v125 = vadd.f32 0.0, %v124
    %v126 = vpop.f32.mrf.mxu0
    %127 = vdwg.mxu0
    %v129 = vrot.slane %v125, 2
    %130 = vrot.lane.b32.xlu0 %v129, 96
    %v131 = vpop.permute.xlu0 %130
    %v133 = vmul.f32 %v52, %v131
    %135 = vset.pattern.permute.xlu0 0
    %136 = vperm.xlu0 %135, %v133
    %v137 = vpop.permute.xlu0 %136
    %v139 = vmul.f32 %v125, %v137
    %vm140 = vcmask 254976
    %141 = vst.msk [vmem:[#allocation5] sm:$0x3] %vm140, %v139
    %142 = vrot.lane.b32.xlu0 %v133, 33
    %v143 = vpop.permute.xlu0 %142
    %v145 = vmul.f32 %v125, %v143
    %147 = vrot.lane.b32.xlu0 %v145, 95
    %v148 = vpop.permute.xlu0 %147
    %vm150 = vcmask 1024
    %151 = vst.msk [vmem:[%s3] sm:$0x3] %vm150, %v148
    // Predicated region
    $region14: #{forward.1} parent=1 // pred_check
      _
    $region15: #{forward.1} parent=1 // pred_check_branch
      %153 = sbr.rel (0) target = $region17
    $region16: #{forward.1} parent=1 // pred_region
      %s155 = ssub.s32 32, 32
      %156 = vsyncadd [#allocation4], %s155
      %s158 = sshll.u32 [#allocation5], 4
      %s159 = int_to_ptr.vmem [resolvable:$true] %s158
      %161 = dma.vmem_to_hbm [thread:$0]  %s159, 32, %s2, [#allocation4]
    $region17: #{forward.1} parent=1 // pred_fallthru
      _
    // Predicated region
    $region18: #{forward.1} parent=1 // pred_check
      _
    $region19: #{forward.1} parent=1 // pred_check_branch
      %163 = sbr.rel (0) target = $region21
    $region20: #{forward.1} parent=1 // pred_region
      _
    $region21: #{forward.1} parent=1 // pred_fallthru
      _
    // Predicated region
    $region22: #{forward.1} parent=1 // pred_check
      _
    $region23: #{forward.1} parent=1 // pred_check_branch
      %165 = sbr.rel (0) target = $region25
    $region24: #{forward.1} parent=1 // pred_region
      %166 = dma.done [#allocation4], 32
    $region25: #{forward.1} parent=1 // pred_fallthru
      _
    // Predicated region
    $region26: #{forward.1} parent=1 // pred_check
      _
    $region27: #{forward.1} parent=1 // pred_check_branch
      %168 = sbr.rel (0) target = $region29
    $region28: #{forward.1} parent=1 // pred_region
      _
    $region29: #{forward.1} parent=1 // pred_fallthru
      _
    %169 = vsyncpa [#allocation3], 1
    %170 = vsyncpa [#allocation4], 1

</llo_original>
